<compile_context>
chip_gen: v6e
topology: v6e:2x2x1
jax: 0.10.0
libtpu: 0.0.40
codegen_flags: <defaults>
</compile_context>

<pallas_src>
import jax
import jax.numpy as jnp
from jax import lax
from jax.experimental import pallas as pl
from jax.experimental.pallas import tpu as pltpu

KH, KW = 3, 3
STRIDE = 2
PAD = 1


def _make_conv_kernel(toh, wo, cin):
    """Build the kernel for one (batch, output-row-block) grid step.

    Refs seen by the kernel:
      x_ref : (1, Hp, Wp2, 2*cin)  bf16  padded NHWC activation, columns paired (free view)
      w_ref : (K, Cout)            bf16  folded weights, k-order (kh, kw, ci)
      o_ref : (1, toh*wo, Cout)    f32   output row-block (row-major over (oh, ow))
      p_ref : (toh*wo, K)          bf16  VMEM scratch holding the im2col patch tile
    """

    def kernel(x_ref, w_ref, o_ref, p_ref):
        oh0 = pl.program_id(1) * toh  # first output row handled by this grid step

        def build_row(oh, carry):
            # Padded input rows 2*(oh0+oh) + {0,1,2} feed output row oh0+oh.
            r = 2 * (oh0 + oh)
            pieces = []
            for kh in range(KH):
                row = x_ref[0, r + kh]                 # (Wp2, 2*cin): cols (2*j, 2*j+1)
                pieces.append(row[0:wo, :])            # taps (kh, kw=0) and (kh, kw=1)
                pieces.append(row[1:wo + 1, 0:cin])    # tap  (kh, kw=2)  -> col 2*ow+2
            # One (wo, 9*cin) patch row-slab, k-order (kh, kw, ci); store into scratch.
            p_ref[pl.ds(oh * wo, wo), :] = jnp.concatenate(pieces, axis=-1)
            return carry

        lax.fori_loop(0, toh, build_row, 0)

        # One big MXU matmul: (toh*wo, 432) @ (432, 192), f32 accumulation, straight to out.
        o_ref[0] = jnp.dot(p_ref[...], w_ref[...], preferred_element_type=jnp.float32)

    return kernel


@jax.jit
def conv2d_48_192_s2_p1(x_nchw, w_oihw):
    """Equivalent of nn.Conv2d(48, 192, 3, stride=2, padding=1, bias=False) (NCHW in/out)."""
    N, Cin, H, W = x_nchw.shape
    Cout = w_oihw.shape[0]
    Ho = (H + 2 * PAD - KH) // STRIDE + 1
    Wo = (W + 2 * PAD - KW) // STRIDE + 1
    Hp = H + 2 * PAD
    Wp = W + 2 * PAD
    wpad_extra = Wp % 2              # keep padded width even for the column-pair view
    Wp2 = (Wp + wpad_extra) // 2
    K = KH * KW * Cin                # 432

    # ---- boundary glue (fuses into one XLA pass): NCHW -> NHWC, zero-pad, cast bf16 ----
    x = jnp.transpose(x_nchw, (0, 2, 3, 1))                              # (N, H, W, Cin)
    x = jnp.pad(x, ((0, 0), (PAD, PAD), (PAD, PAD + wpad_extra), (0, 0)))
    xp = x.astype(jnp.bfloat16).reshape(N, Hp, Wp2, 2 * Cin)             # free reshape

    # weights (Cout, Cin, KH, KW) -> (K, Cout) with k-order (kh, kw, ci) matching the kernel.
    wmat = jnp.transpose(w_oihw, (2, 3, 1, 0)).reshape(K, Cout).astype(jnp.bfloat16)

    # ---- row-block tiling: exact division (no M padding); >=2 parallel tiles for megacore ----
    nblk = 2 if (Ho % 2 == 0 and ((Ho // 2) * Wo) % 8 == 0) else 1
    toh = Ho // nblk
    mb = toh * Wo

    kernel = _make_conv_kernel(toh, Wo, Cin)

    cost = pl.CostEstimate(
        flops=2 * N * Ho * Wo * K * Cout,
        transcendentals=0,
        bytes_accessed=xp.size * 2 + wmat.size * 2 + N * Ho * Wo * Cout * 4,
    )

    out2d = pl.pallas_call(
        kernel,
        out_shape=jax.ShapeDtypeStruct((N, Ho * Wo, Cout), jnp.float32),
        grid_spec=pltpu.PrefetchScalarGridSpec(
            num_scalar_prefetch=0,
            grid=(N, nblk),
            in_specs=[
                # Full padded image per batch; constant over the row-block axis, so it is
                # only DMA'd when the batch index changes.
                pl.BlockSpec((1, Hp, Wp2, 2 * Cin), lambda n, g: (n, 0, 0, 0)),
                # Fully-resident folded weights.
                pl.BlockSpec((K, Cout), lambda n, g: (0, 0)),
            ],
            out_specs=pl.BlockSpec((1, mb, Cout), lambda n, g: (n, g, 0)),
            scratch_shapes=[pltpu.VMEM((mb, K), jnp.bfloat16)],
        ),
        compiler_params=pltpu.CompilerParams(
            dimension_semantics=("parallel", "parallel"),
        ),
        cost_estimate=cost,
    )(xp, wmat)

    out = out2d.reshape(N, Ho, Wo, Cout)
    return jnp.transpose(out, (0, 3, 1, 2)).astype(x_nchw.dtype)  # back to NCHW


if __name__ == "__main__":
    key = jax.random.PRNGKey(0)
    kx, kw_key = jax.random.split(key)

    # Channels are fixed by the layer (48 -> 192); spatial reduced 56 -> 16, batch = 2.
    N, Cin, H, W, Cout = 2, 48, 16, 16, 192
    x = jax.random.normal(kx, (N, Cin, H, W), dtype=jnp.float32)

    # Deterministic Kaiming-style init for the conv weight (Cout, Cin, KH, KW).
    fan_in = Cin * KH * KW
    w = jax.random.normal(kw_key, (Cout, Cin, KH, KW), dtype=jnp.float32) * (1.0 / fan_in) ** 0.5

    out = jax.block_until_ready(conv2d_48_192_s2_p1(x, w))

    Ho = (H + 2 * PAD - KH) // STRIDE + 1
    Wo = (W + 2 * PAD - KW) // STRIDE + 1
    assert out.shape == (N, Cout, Ho, Wo)

    # Reference 1: XLA conv on the same bf16-quantized inputs (f32 math) -> tight check
    # of the kernel's actual computation (bf16 feed, f32 accumulate).
    xq = x.astype(jnp.bfloat16).astype(jnp.float32)
    wq = w.astype(jnp.bfloat16).astype(jnp.float32)
    ref_q = lax.conv_general_dilated(
        xq, wq, window_strides=(STRIDE, STRIDE), padding=((PAD, PAD), (PAD, PAD)),
        dimension_numbers=("NCHW", "OIHW", "NCHW"))
    assert jnp.allclose(out, ref_q, atol=1e-2, rtol=1e-2)

    # Reference 2: full-f32 conv (the PyTorch module's semantics); looser tolerance is
    # expected because the kernel intentionally feeds the MXU bf16 (memory-bound regime).
    ref = lax.conv_general_dilated(
        x, w, window_strides=(STRIDE, STRIDE), padding=((PAD, PAD), (PAD, PAD)),
        dimension_numbers=("NCHW", "OIHW", "NCHW"))
    assert jnp.allclose(out, ref, atol=5e-2, rtol=5e-2)

    print("KERNEL_OK")
</pallas_src>

<mosaic_0001>
module attributes {stable_mosaic.version = 11 : i64} {
  func.func @kernel(%arg0: i32, %arg1: i32, %arg2: memref<1x18x9x96xbf16, #tpu.memory_space<vmem>>, %arg3: memref<432x192xbf16, #tpu.memory_space<vmem>>, %arg4: memref<1x32x192xf32, #tpu.memory_space<vmem>>, %arg5: memref<32x432xbf16, #tpu.memory_space<vmem>>) attributes {dimension_semantics = [#tpu.dimension_semantics<parallel>, #tpu.dimension_semantics<parallel>], iteration_bounds = array<i64: 2, 2>, scalar_prefetch = 0 : i64, scratch_operands = 1 : i64, tpu.core_type = #tpu.core_type<tc>, window_params = [{transform_indices = @transform_0, window_bounds = array<i64: 1, 18, 9, 96>}, {pipeline_mode = #tpu.pipeline_mode<synchronous>, transform_indices = @transform_1, window_bounds = array<i64: 432, 192>}, {transform_indices = @transform_2, window_bounds = array<i64: 1, 32, 192>}]} {
    %c4_i32 = arith.constant 4 : i32
    %0 = arith.muli %arg1, %c4_i32 : i32
    %c0_i32 = arith.constant 0 : i32
    %c4_i32_0 = arith.constant 4 : i32
    %1 = arith.addi %c0_i32, %c4_i32_0 : i32
    %c1_i32 = arith.constant 1 : i32
    scf.for %arg6 = %c0_i32 to %1 step %c1_i32  : i32 {
      %8 = arith.addi %0, %arg6 : i32
      %c2_i32 = arith.constant 2 : i32
      %9 = arith.muli %c2_i32, %8 : i32
      %c0_i32_8 = arith.constant 0 : i32
      %10 = arith.addi %9, %c0_i32_8 : i32
      %c0_9 = arith.constant 0 : index
      %11 = arith.index_cast %10 : i32 to index
      %c0_10 = arith.constant 0 : index
      %c0_11 = arith.constant 0 : index
      %12 = vector.load %arg2[%c0_9, %11, %c0_10, %c0_11] : memref<1x18x9x96xbf16, #tpu.memory_space<vmem>>, vector<1x1x9x96xbf16>
      %13 = vector.shape_cast %12 : vector<1x1x9x96xbf16> to vector<9x96xbf16>
      %14 = vector.extract_strided_slice %13 {offsets = [0, 0], sizes = [8, 96], strides = [1, 1]} : vector<9x96xbf16> to vector<8x96xbf16>
      %15 = vector.extract_strided_slice %13 {offsets = [1, 0], sizes = [8, 48], strides = [1, 1]} : vector<9x96xbf16> to vector<8x48xbf16>
      %c1_i32_12 = arith.constant 1 : i32
      %16 = arith.addi %9, %c1_i32_12 : i32
      %c0_13 = arith.constant 0 : index
      %17 = arith.index_cast %16 : i32 to index
      %c0_14 = arith.constant 0 : index
      %c0_15 = arith.constant 0 : index
      %18 = vector.load %arg2[%c0_13, %17, %c0_14, %c0_15] : memref<1x18x9x96xbf16, #tpu.memory_space<vmem>>, vector<1x1x9x96xbf16>
      %19 = vector.shape_cast %18 : vector<1x1x9x96xbf16> to vector<9x96xbf16>
      %20 = vector.extract_strided_slice %19 {offsets = [0, 0], sizes = [8, 96], strides = [1, 1]} : vector<9x96xbf16> to vector<8x96xbf16>
      %21 = vector.extract_strided_slice %19 {offsets = [1, 0], sizes = [8, 48], strides = [1, 1]} : vector<9x96xbf16> to vector<8x48xbf16>
      %c2_i32_16 = arith.constant 2 : i32
      %22 = arith.addi %9, %c2_i32_16 : i32
      %c0_17 = arith.constant 0 : index
      %23 = arith.index_cast %22 : i32 to index
      %c0_18 = arith.constant 0 : index
      %c0_19 = arith.constant 0 : index
      %24 = vector.load %arg2[%c0_17, %23, %c0_18, %c0_19] : memref<1x18x9x96xbf16, #tpu.memory_space<vmem>>, vector<1x1x9x96xbf16>
      %25 = vector.shape_cast %24 : vector<1x1x9x96xbf16> to vector<9x96xbf16>
      %26 = vector.extract_strided_slice %25 {offsets = [0, 0], sizes = [8, 96], strides = [1, 1]} : vector<9x96xbf16> to vector<8x96xbf16>
      %27 = vector.extract_strided_slice %25 {offsets = [1, 0], sizes = [8, 48], strides = [1, 1]} : vector<9x96xbf16> to vector<8x48xbf16>
      %28 = tpu.concatenate %14, %15, %20, %21, %26, %27 in 1 : vector<8x96xbf16>, vector<8x48xbf16>, vector<8x96xbf16>, vector<8x48xbf16>, vector<8x96xbf16>, vector<8x48xbf16> -> vector<8x432xbf16>
      %c8_i32 = arith.constant 8 : i32
      %29 = arith.muli %arg6, %c8_i32 : i32
      %30 = arith.index_cast %29 : i32 to index
      %c0_20 = arith.constant 0 : index
      %31 = vector.load %arg5[%30, %c0_20] : memref<32x432xbf16, #tpu.memory_space<vmem>>, vector<8x432xbf16>
      tpu.vector_store %arg5[%30, %c0_20], %28 {strides = array<i32>} : memref<32x432xbf16, #tpu.memory_space<vmem>>, vector<8x432xbf16>,
    }
    %c4_i32_1 = arith.constant 4 : i32
    %c0 = arith.constant 0 : index
    %c0_2 = arith.constant 0 : index
    %2 = vector.load %arg5[%c0, %c0_2] : memref<32x432xbf16, #tpu.memory_space<vmem>>, vector<32x432xbf16>
    %c0_3 = arith.constant 0 : index
    %c0_4 = arith.constant 0 : index
    %3 = vector.load %arg3[%c0_3, %c0_4] : memref<432x192xbf16, #tpu.memory_space<vmem>>, vector<432x192xbf16>
    %cst = arith.constant dense<0.000000e+00> : vector<32x192xf32>
    %4 = tpu.matmul %2, %3, %cst {dimension_numbers = #tpu.dot_dimension_numbers<[1], [0], [0], [1], [0, 0, 1, 1], [], []>} : vector<32x432xbf16>, vector<432x192xbf16>, vector<32x192xf32> -> vector<32x192xf32>
    %c0_5 = arith.constant 0 : index
    %c0_6 = arith.constant 0 : index
    %c0_7 = arith.constant 0 : index
    %5 = vector.load %arg4[%c0_5, %c0_6, %c0_7] : memref<1x32x192xf32, #tpu.memory_space<vmem>>, vector<1x32x192xf32>
    %6 = vector.shape_cast %5 : vector<1x32x192xf32> to vector<32x192xf32>
    %7 = vector.shape_cast %4 : vector<32x192xf32> to vector<1x32x192xf32>
    tpu.vector_store %arg4[%c0_5, %c0_6, %c0_7], %7 {strides = array<i32>} : memref<1x32x192xf32, #tpu.memory_space<vmem>>, vector<1x32x192xf32>,
    return
  }
  func.func @transform_0(%arg0: i32, %arg1: i32) -> (i32, i32, i32, i32) {
    %c0_i32 = arith.constant 0 : i32
    %c0_i32_0 = arith.constant 0 : i32
    %c0_i32_1 = arith.constant 0 : i32
    %c0_i32_2 = arith.constant 0 : i32
    return %arg0, %c0_i32, %c0_i32_0, %c0_i32_1 : i32, i32, i32, i32
  }
  func.func @transform_1(%arg0: i32, %arg1: i32) -> (i32, i32) {
    %c0_i32 = arith.constant 0 : i32
    %c0_i32_0 = arith.constant 0 : i32
    %c0_i32_1 = arith.constant 0 : i32
    return %c0_i32, %c0_i32_0 : i32, i32
  }
  func.func @transform_2(%arg0: i32, %arg1: i32) -> (i32, i32, i32) {
    %c0_i32 = arith.constant 0 : i32
    %c0_i32_0 = arith.constant 0 : i32
    return %arg0, %arg1, %c0_i32 : i32, i32, i32
  }
}

</mosaic_0001>

<llo_original>
// kernel: conv2d_48_192_s2_p1.1
$region0: #{conv2d_48_192_s2_p1.1}
  #allocation0 [shape = 'u32[]', space=smem, size = 0x4, offset = 0x4, fixed_abs, tag = 'smem constant byte address 0x4 - core index']
  #allocation1 [shape = 'u32[144,128]{1,0:T(1,128)}', space=vmem, size = 0x12000, scoped, tag = 'internal scratch']
  #allocation2 [shape = 'bf16[32,432]{1,0:T(8,128)(2,1)}', space=vmem, size = 0x8000, scoped, tag = 'scratch operand']
  %s0 = inlined_call_operand.vmem [shape: bf16[2,18,9,96], index: 0, kind: input, shape index: {}]
  %s1 = inlined_call_operand.vmem [shape: bf16[432,192], index: 1, kind: input, shape index: {}]
  %s2 = inlined_call_operand.hbm [shape: f32[2,64,192], index: 2, kind: output, shape index: {}]
  %s3 = sld [smem:[#allocation0]]
  $region48: #{conv2d_48_192_s2_p1.1} parent=0
    _
  %s5 = ssub.s32 1, %s3
  %s6 = scalar_select 0, %s5, %s3
  $region1: #{conv2d_48_192_s2_p1.1} parent=0
    #allocation3 [shape = 'u8[65536]{0}', space=vmem, size = 0x10000, scoped, tag = 'output window, operand 0']
    #allocation4 [shape = 's32[2]{0}', space=sflag, size = 0x8, scoped, tag = 'scoped memory for conv2d_48_192_s2_p1.1']
    %7 = vsyncpa [#allocation4], 0
    %s8 = scalar_lea.sflag [#allocation4], 1
    %9 = vsyncpa %s8, 0
    loop: start=0, step=1, limit=6
    $region2: #{conv2d_48_192_s2_p1.1} parent=1 // loop_pre_header
      _
    $region3: #{conv2d_48_192_s2_p1.1} parent=1 // loop_header
      %s11 = sphi 0, %s15
      %p12 = scmp.ge.s32.totalorder %s11, 6
      %s18 = sphi 0, %s30
      %s19 = sphi 0, %s26
      %s20 = sphi 0, %s18
      %s21 = sphi 0, %s19
      %s22 = sphi 0, %s20
      %s23 = sphi 0, %s21
      %s33 = sphi 0, %s35
      %s36 = sphi 0, %s33
      %s37 = sphi 0, %s36
      %s53 = sphi 0, %s37
      %s57 = sphi 0, %s57
      %s59 = sphi 0, %s57
      %s60 = sphi 0, %s59
      %s74 = sphi 0, %s60
      %s82 = sphi 0, %s84
      %s85 = sphi 0, %s82
      %s86 = sphi 0, %s85
      %s102 = sphi 0, %s86
    $region4: #{conv2d_48_192_s2_p1.1} parent=1 // loop_header_branch
      %14 = sbr.rel (%p12) target = $region8
    $region5: #{conv2d_48_192_s2_p1.1} parent=1 // loop_body
      %s16 = ssub.s32 %s11, 1
      %s17 = ssub.s32 %s11, 2
      %s24 = sadd.s32 1, %s19
      %p25 = scmp.ge.s32.totalorder %s24, 2
      %s26 = scalar_select %p25, 0, %s24
      %s27 = sadd.s32 1, %s18
      %s28 = scalar_select %p25, %s27, %s18
      %p29 = scmp.ge.s32.totalorder %s28, 2
      %s30 = scalar_select %p29, 0, %s28
      %s31 = ssub.s32 %s18, %s30
      %p32 = scmp.eq.s32.totalorder %s31, 0
      %s34 = sadd.s32 %s33, 1
      %s35 = scalar_select %p32, %s33, %s34
      %p38 = pneg %p32
      %p39 = scmp.eq.s32.totalorder %s11, 3
      %p40 = por %p38, %p39
      %p41 = scmp.ne.s32.totalorder %s33, %s36
      %p42 = scmp.eq.s32.totalorder %s11, 0
      %p43 = por %p41, %p42
      %p44 = scmp.ne.s32.totalorder %s33, %s36
      %p45 = scmp.eq.s32.totalorder %s16, 3
      %p46 = por %p44, %p45
      %p47 = scmp.ne.s32.totalorder %s36, %s37
      %p48 = scmp.eq.s32.totalorder %s16, 0
      %p49 = por %p47, %p48
      %p50 = scmp.ne.s32.totalorder %s36, %s37
      %p51 = scmp.eq.s32.totalorder %s17, 3
      %p52 = por %p50, %p51
      %p54 = scmp.ne.s32.totalorder %s37, %s53
      %p55 = scmp.eq.s32.totalorder %s17, 0
      %p56 = por %p54, %p55
      %s58 = sadd.s32 %s57, 1
      %p61 = scmp.eq.s32.totalorder %s11, 3
      %p62 = scmp.ne.s32.totalorder %s57, %s59
      %p63 = scmp.eq.s32.totalorder %s11, 0
      %p64 = por %p62, %p63
      %p65 = scmp.ne.s32.totalorder %s57, %s59
      %p66 = scmp.eq.s32.totalorder %s16, 3
      %p67 = por %p65, %p66
      %p68 = scmp.ne.s32.totalorder %s59, %s60
      %p69 = scmp.eq.s32.totalorder %s16, 0
      %p70 = por %p68, %p69
      %p71 = scmp.ne.s32.totalorder %s59, %s60
      %p72 = scmp.eq.s32.totalorder %s17, 3
      %p73 = por %p71, %p72
      %p75 = scmp.ne.s32.totalorder %s60, %s74
      %p76 = scmp.eq.s32.totalorder %s17, 0
      %p77 = por %p75, %p76
      %s78 = ssub.s32 %s18, %s30
      %s79 = ssub.s32 %s19, %s26
      %s80 = sor.u32 %s78, %s79
      %p81 = scmp.eq.s32.totalorder %s80, 0
      %s83 = sadd.s32 %s82, 1
      %s84 = scalar_select %p81, %s82, %s83
      %p87 = pneg %p81
      %p88 = scmp.eq.s32.totalorder %s11, 3
      %p89 = por %p87, %p88
      %p90 = scmp.ne.s32.totalorder %s82, %s85
      %p91 = scmp.eq.s32.totalorder %s11, 0
      %p92 = por %p90, %p91
      %p93 = scmp.ne.s32.totalorder %s82, %s85
      %p94 = scmp.eq.s32.totalorder %s16, 3
      %p95 = por %p93, %p94
      %p96 = scmp.ne.s32.totalorder %s85, %s86
      %p97 = scmp.eq.s32.totalorder %s16, 0
      %p98 = por %p96, %p97
      %p99 = scmp.ne.s32.totalorder %s85, %s86
      %p100 = scmp.eq.s32.totalorder %s17, 3
      %p101 = por %p99, %p100
      %p103 = scmp.ne.s32.totalorder %s86, %s102
      %p104 = scmp.eq.s32.totalorder %s17, 0
      %p105 = por %p103, %p104
      %p106 = scmp.le.s32.totalorder 1, %s11
      %p107 = scmp.lt.s32.totalorder %s11, 5
      %p108 = pnand %p106, %p107
      %p109 = pneg %p108
      // Predicated region
      $region9: #{conv2d_48_192_s2_p1.1} parent=5 // pred_check
        _
      $region10: #{conv2d_48_192_s2_p1.1} parent=5 // pred_check_branch
        %111 = sbr.rel (%p108) target = $region12
      $region11: #{conv2d_48_192_s2_p1.1} parent=5 // pred_region
        %s112 = ssub.s32 %s11, 1
        // Predicated region
        $region13: #{conv2d_48_192_s2_p1.1} parent=11 // pred_check
          %p113 = pneg %p70
        $region14: #{conv2d_48_192_s2_p1.1} parent=11 // pred_check_branch
          %115 = sbr.rel (%p113) target = $region16
        $region15: #{conv2d_48_192_s2_p1.1} parent=11 // pred_region
          _
        $region16: #{conv2d_48_192_s2_p1.1} parent=11 // pred_fallthru
          _
      $region12: #{conv2d_48_192_s2_p1.1} parent=5 // pred_fallthru
        _
      %p116 = scmp.lt.s32.totalorder %s11, 4
      // Predicated region
      $region17: #{conv2d_48_192_s2_p1.1} parent=5 // pred_check
        %p117 = pneg %p116
      $region18: #{conv2d_48_192_s2_p1.1} parent=5 // pred_check_branch
        %119 = sbr.rel (%p117) target = $region20
      $region19: #{conv2d_48_192_s2_p1.1} parent=5 // pred_region
        // Predicated region
        $region21: #{conv2d_48_192_s2_p1.1} parent=19 // pred_check
          %p120 = pneg %p43
        $region22: #{conv2d_48_192_s2_p1.1} parent=19 // pred_check_branch
          %122 = sbr.rel (%p120) target = $region24
        $region23: #{conv2d_48_192_s2_p1.1} parent=19 // pred_region
          %p123 = scmp.lt.s32.totalorder %s18, 1
          %s124 = scalar_select %p123, %s18, 1
          %s125 = smul.addr %s124, 36
          %s126 = smul.addr %s125, 4
          %s127 = scalar_lea.vmem %s0, %s126
        $region24: #{conv2d_48_192_s2_p1.1} parent=19 // pred_fallthru
          _
      $region20: #{conv2d_48_192_s2_p1.1} parent=5 // pred_fallthru
        _
      %p128 = scmp.le.s32.totalorder 1, %s11
      %p129 = scmp.lt.s32.totalorder %s11, 5
      %p130 = pnand %p128, %p129
      %p131 = pneg %p130
      // Predicated region
      $region25: #{conv2d_48_192_s2_p1.1} parent=5 // pred_check
        _
      $region26: #{conv2d_48_192_s2_p1.1} parent=5 // pred_check_branch
        %133 = sbr.rel (%p130) target = $region28
      $region27: #{conv2d_48_192_s2_p1.1} parent=5 // pred_region
        %s134 = ssub.s32 %s11, 1
        %p135 = scmp.lt.s32.totalorder %s20, 1
        %s136 = scalar_select %p135, %s20, 1
        %s137 = smul.addr %s136, 36
        %s138 = smul.addr %s137, 4
        %s139 = scalar_lea.vmem %s0, %s138
        %p140 = pneg %p49
        %p141 = pneg %p46
        %p142 = pneg %p70
        %p143 = pneg %p67
        %p144 = pneg %p98
        %p145 = pneg %p95
        %s146 = sand.u32 %s85, 1
        %s147 = scalar_lea.sflag [#allocation4], %s146
        %s148 = sand.u32 %s85, 1
        %s149 = smul.addr %s148, 64
        %s150 = scalar_lea.vmem [#allocation3], %s149
        %p151 = scmp.lt.s32.totalorder %s20, 1
        %s152 = scalar_select %p151, %s20, 1
        %s153 = smul.addr %s152, 36
        %s154 = smul.addr %s153, 4
        %s155 = scalar_lea.vmem %s0, %s154
        %s156 = smul.u32 4, %s21
        %s158 = smul.u32 %s21, 4
        loop: start=0, step=1, limit=4
        $region29: #{conv2d_48_192_s2_p1.1} parent=27 // loop_pre_header
          _
        $region30: #{conv2d_48_192_s2_p1.1} parent=27 // loop_header
          %s160 = sphi 0, %s164
          %p161 = scmp.ge.s32.totalorder %s160, 4
        $region31: #{conv2d_48_192_s2_p1.1} parent=27 // loop_header_branch
          %163 = sbr.rel (%p161) target = $region35
        $region32: #{conv2d_48_192_s2_p1.1} parent=27 // loop_body
          %s165 = sadd.s32 %s158, %s160
          %s166 = smul.u32 %s165, 2
          %s167 = smul.u32 %s166, 2
          %s168 = smul.addr %s167, 4
          %s169 = scalar_lea.vmem %s155, %s168
          %v170 = vld [vmem:[%s169] sm:$0xf]
          %v171 = vld [vmem:[%s169 + $0x4] sm:$0x1]
          %s172 = sadd.s32 %s166, 1
          %s173 = smul.u32 %s172, 2
          %s174 = smul.addr %s173, 4
          %s175 = scalar_lea.vmem %s155, %s174
          %v176 = vld [vmem:[%s175] sm:$0xf]
          %v177 = vld [vmem:[%s175 + $0x4] sm:$0x1]
          %s178 = sadd.s32 %s166, 2
          %s179 = smul.u32 %s178, 2
          %s180 = smul.addr %s179, 4
          %s181 = scalar_lea.vmem %s155, %s180
          %v182 = vld [vmem:[%s181] sm:$0xf]
          %v183 = vld [vmem:[%s181 + $0x4] sm:$0x1]
          %v186 = vunpack.c.l.b16 %v170
          %v187 = vunpack.c.l.b16 %v171
          %v188 = vpack.c.b16 %v187, %v186
          %v190 = vshrl.u32 %v188, 16
          %v192 = vshll.u32 %v188, 16
          %v194 = vrot.slane %v192, 1
          %v195 = vor.u32 %v190, %v194
          %196 = vrot.lane.b32.xlu0 %v195, 96
          %v197 = vpop.permute.xlu0 %196
          %v199 = vunpack.c.l.b16 %v176
          %v200 = vpack.c.b16 %v199, %v199
          %201 = vrot.lane.b32.xlu0 %v200, 16
          %v202 = vpop.permute.xlu0 %201
          %v204 = vunpack.c.l.b16 %v177
          %v205 = vpack.c.b16 %v204, %v199
          %v207 = vshrl.u32 %v205, 16
          %v209 = vshll.u32 %v205, 16
          %v211 = vrot.slane %v209, 1
          %v212 = vor.u32 %v207, %v211
          %213 = vrot.lane.b32.xlu0 %v212, 112
          %v214 = vpop.permute.xlu0 %213
          %v216 = vunpack.c.l.b16 %v182
          %v217 = vpack.c.b16 %v216, %v216
          %218 = vrot.lane.b32.xlu0 %v217, 32
          %v219 = vpop.permute.xlu0 %218
          %v221 = vunpack.c.l.b16 %v183
          %v222 = vpack.c.b16 %v221, %v216
          %v224 = vshrl.u32 %v222, 16
          %v226 = vshll.u32 %v222, 16
          %v228 = vrot.slane %v226, 1
          %v229 = vor.u32 %v224, %v228
          %vm230 = vcmask 785408
          %v233 = vsel %vm230, %v170, %v197
          %vm234 = vcmask 130048
          %v236 = vsel %vm234, %v197, %v202
          %vm237 = vcmask 916480
          %v239 = vsel %vm237, %v236, %v214
          %vm240 = vcmask 261120
          %v242 = vsel %vm240, %v214, %v219
          %s243 = smul.u32 %s160, 8
          %v247 = vunpack.c.l.b16 %v233
          %v248 = vunpack.c.l.b16 %v239
          %v249 = vunpack.c.l.b16 %v242
          %v250 = vunpack.c.l.b16 %v229
          %v251 = vpack.c.b16 %v248, %v247
          %v252 = vpack.c.b16 %v250, %v249
          %s255 = sshra.s32 %s243, 3
          %s256 = sand.u32 %s243, 7
          %s257 = smul.u32 %s255, 4
          %s258 = smul.addr %s257, 4
          %s259 = scalar_lea.vmem [#allocation2], %s258
          %260 = vst [vmem:[%s259] sm:$0xff] %v251
          %vm261 = vcmask 1043456
          %vm262 = vcmask 392196
          %vm263 = vmor %vm262, %vm261
          %264 = vst.msk [vmem:[%s259 + $0x8] sm:$0xff] %vm263, %v252
        $region33: #{conv2d_48_192_s2_p1.1} parent=27 // loop_footer
          %s164 = sadd.s32 1, %s160
        $region34: #{conv2d_48_192_s2_p1.1} parent=27 // loop_footer_branch
          %159 = sbr.rel target = $region30
        $region35: #{conv2d_48_192_s2_p1.1} parent=27 // loop_exit
          _
        %v265 = vld [vmem:[#allocation2] sm:$0xff]
        %v266 = vld [vmem:[#allocation2 + $0x8] sm:$0xff]
        %v267 = vld [vmem:[#allocation2 + $0x10] sm:$0xff]
        %v268 = vld [vmem:[#allocation2 + $0x18] sm:$0xff]
        %v269 = vld [vmem:[#allocation2 + $0x20] sm:$0xff]
        %v270 = vld [vmem:[#allocation2 + $0x28] sm:$0xff]
        %v271 = vld [vmem:[#allocation2 + $0x30] sm:$0xff]
        %v272 = vld [vmem:[#allocation2 + $0x38] sm:$0xff]
        %v273 = vld [vmem:[%s1] sm:$0xff]
        %v274 = vld [vmem:[%s1 + $0x8] sm:$0xff]
        %v275 = vld [vmem:[%s1 + $0x10] sm:$0xff]
        %v276 = vld [vmem:[%s1 + $0x18] sm:$0xff]
        %v277 = vld [vmem:[%s1 + $0x20] sm:$0xff]
        %v278 = vld [vmem:[%s1 + $0x28] sm:$0xff]
        %v279 = vld [vmem:[%s1 + $0x30] sm:$0xff]
        %v280 = vld [vmem:[%s1 + $0x38] sm:$0xff]
        %v281 = vld [vmem:[%s1 + $0x40] sm:$0xff]
        %v282 = vld [vmem:[%s1 + $0x48] sm:$0xff]
        %v283 = vld [vmem:[%s1 + $0x50] sm:$0xff]
        %v284 = vld [vmem:[%s1 + $0x58] sm:$0xff]
        %v285 = vld [vmem:[%s1 + $0x60] sm:$0xff]
        %v286 = vld [vmem:[%s1 + $0x68] sm:$0xff]
        %v287 = vld [vmem:[%s1 + $0x70] sm:$0xff]
        %v288 = vld [vmem:[%s1 + $0x78] sm:$0xff]
        %v289 = vld [vmem:[%s1 + $0x80] sm:$0xff]
        %v290 = vld [vmem:[%s1 + $0x88] sm:$0xff]
        %v291 = vld [vmem:[%s1 + $0x90] sm:$0xff]
        %v292 = vld [vmem:[%s1 + $0x98] sm:$0xff]
        %v293 = vld [vmem:[%s1 + $0xa0] sm:$0xff]
        %v294 = vld [vmem:[%s1 + $0xa8] sm:$0xff]
        %v295 = vld [vmem:[%s1 + $0xb0] sm:$0xff]
        %v296 = vld [vmem:[%s1 + $0xb8] sm:$0xff]
        %v297 = vld [vmem:[%s1 + $0xc0] sm:$0xff]
        %v298 = vld [vmem:[%s1 + $0xc8] sm:$0xff]
        %v299 = vld [vmem:[%s1 + $0xd0] sm:$0xff]
        %v300 = vld [vmem:[%s1 + $0xd8] sm:$0xff]
        %v301 = vld [vmem:[%s1 + $0xe0] sm:$0xff]
        %v302 = vld [vmem:[%s1 + $0xe8] sm:$0xff]
        %v303 = vld [vmem:[%s1 + $0xf0] sm:$0xff]
        %v304 = vld [vmem:[%s1 + $0xf8] sm:$0xff]
        %v305 = vld [vmem:[%s1 + $0x100] sm:$0xff]
        %v306 = vld [vmem:[%s1 + $0x108] sm:$0xff]
        %v307 = vld [vmem:[%s1 + $0x110] sm:$0xff]
        %v308 = vld [vmem:[%s1 + $0x118] sm:$0xff]
        %v309 = vld [vmem:[%s1 + $0x120] sm:$0xff]
        %v310 = vld [vmem:[%s1 + $0x128] sm:$0xff]
        %v311 = vld [vmem:[%s1 + $0x130] sm:$0xff]
        %v312 = vld [vmem:[%s1 + $0x138] sm:$0xff]
        %v313 = vld [vmem:[%s1 + $0x140] sm:$0xff]
        %v314 = vld [vmem:[%s1 + $0x148] sm:$0xff]
        %v315 = vld [vmem:[%s1 + $0x150] sm:$0xff]
        %v316 = vld [vmem:[%s1 + $0x158] sm:$0xff]
        %v317 = vld [vmem:[%s1 + $0x160] sm:$0xff]
        %v318 = vld [vmem:[%s1 + $0x168] sm:$0xff]
        %v319 = vld [vmem:[%s1 + $0x170] sm:$0xff]
        %v320 = vld [vmem:[%s1 + $0x178] sm:$0xff]
        %v321 = vld [vmem:[%s1 + $0x180] sm:$0xff]
        %v322 = vld [vmem:[%s1 + $0x188] sm:$0xff]
        %v323 = vld [vmem:[%s1 + $0x190] sm:$0xff]
        %v324 = vld [vmem:[%s1 + $0x198] sm:$0xff]
        %v325 = vld [vmem:[%s1 + $0x1a0] sm:$0xff]
        %v326 = vld [vmem:[%s1 + $0x1a8] sm:$0xff]
        %v335 = vunpack.c.l.b16 %v265
        %v336 = vunpack.c.h.b16 %v265
        %v337 = vunpack.c.l.b16 %v266
        %v338 = vunpack.c.h.b16 %v266
        %v339 = vunpack.c.l.b16 %v267
        %v340 = vunpack.c.h.b16 %v267
        %v341 = vunpack.c.l.b16 %v268
        %v342 = vunpack.c.h.b16 %v268
        %v343 = vunpack.c.l.b16 %v269
        %v344 = vunpack.c.h.b16 %v269
        %v345 = vunpack.c.l.b16 %v270
        %v346 = vunpack.c.h.b16 %v270
        %v347 = vunpack.c.l.b16 %v271
        %v348 = vunpack.c.h.b16 %v271
        %v349 = vunpack.c.l.b16 %v272
        %v350 = vunpack.c.h.b16 %v272
        %v351 = vpack.c.b16 %v339, %v335
        %v352 = vpack.c.b16 %v340, %v336
        %v353 = vpack.c.b16 %v341, %v337
        %v354 = vpack.c.b16 %v342, %v338
        %v355 = vpack.c.b16 %v347, %v343
        %v356 = vpack.c.b16 %v348, %v344
        %v357 = vpack.c.b16 %v349, %v345
        %v358 = vpack.c.b16 %v350, %v346
        %v419 = vunpack.c.l.b16 %v273
        %v420 = vunpack.c.h.b16 %v273
        %v421 = vunpack.c.l.b16 %v274
        %v422 = vunpack.c.h.b16 %v274
        %v423 = vunpack.c.l.b16 %v275
        %v424 = vunpack.c.h.b16 %v275
        %v425 = vunpack.c.l.b16 %v276
        %v426 = vunpack.c.h.b16 %v276
        %v427 = vunpack.c.l.b16 %v277
        %v428 = vunpack.c.h.b16 %v277
        %v429 = vunpack.c.l.b16 %v278
        %v430 = vunpack.c.h.b16 %v278
        %v431 = vunpack.c.l.b16 %v279
        %v432 = vunpack.c.h.b16 %v279
        %v433 = vunpack.c.l.b16 %v280
        %v434 = vunpack.c.h.b16 %v280
        %v435 = vunpack.c.l.b16 %v281
        %v436 = vunpack.c.h.b16 %v281
        %v437 = vunpack.c.l.b16 %v282
        %v438 = vunpack.c.h.b16 %v282
        %v439 = vunpack.c.l.b16 %v283
        %v440 = vunpack.c.h.b16 %v283
        %v441 = vunpack.c.l.b16 %v284
        %v442 = vunpack.c.h.b16 %v284
        %v443 = vunpack.c.l.b16 %v285
        %v444 = vunpack.c.h.b16 %v285
        %v445 = vunpack.c.l.b16 %v286
        %v446 = vunpack.c.h.b16 %v286
        %v447 = vunpack.c.l.b16 %v287
        %v448 = vunpack.c.h.b16 %v287
        %v449 = vunpack.c.l.b16 %v288
        %v450 = vunpack.c.h.b16 %v288
        %v451 = vunpack.c.l.b16 %v289
        %v452 = vunpack.c.h.b16 %v289
        %v453 = vunpack.c.l.b16 %v290
        %v454 = vunpack.c.h.b16 %v290
        %v455 = vunpack.c.l.b16 %v291
        %v456 = vunpack.c.h.b16 %v291
        %v457 = vunpack.c.l.b16 %v292
        %v458 = vunpack.c.h.b16 %v292
        %v459 = vunpack.c.l.b16 %v293
        %v460 = vunpack.c.h.b16 %v293
        %v461 = vunpack.c.l.b16 %v294
        %v462 = vunpack.c.h.b16 %v294
        %v463 = vunpack.c.l.b16 %v295
        %v464 = vunpack.c.h.b16 %v295
        %v465 = vunpack.c.l.b16 %v296
        %v466 = vunpack.c.h.b16 %v296
        %v467 = vunpack.c.l.b16 %v297
        %v468 = vunpack.c.h.b16 %v297
        %v469 = vunpack.c.l.b16 %v298
        %v470 = vunpack.c.h.b16 %v298
        %v471 = vunpack.c.l.b16 %v299
        %v472 = vunpack.c.h.b16 %v299
        %v473 = vunpack.c.l.b16 %v300
        %v474 = vunpack.c.h.b16 %v300
        %v475 = vunpack.c.l.b16 %v301
        %v476 = vunpack.c.h.b16 %v301
        %v477 = vunpack.c.l.b16 %v302
        %v478 = vunpack.c.h.b16 %v302
        %v479 = vunpack.c.l.b16 %v303
        %v480 = vunpack.c.h.b16 %v303
        %v481 = vunpack.c.l.b16 %v304
        %v482 = vunpack.c.h.b16 %v304
        %v483 = vunpack.c.l.b16 %v305
        %v484 = vunpack.c.h.b16 %v305
        %v485 = vunpack.c.l.b16 %v306
        %v486 = vunpack.c.h.b16 %v306
        %v487 = vunpack.c.l.b16 %v307
        %v488 = vunpack.c.h.b16 %v307
        %v489 = vunpack.c.l.b16 %v308
        %v490 = vunpack.c.h.b16 %v308
        %v491 = vunpack.c.l.b16 %v309
        %v492 = vunpack.c.h.b16 %v309
        %v493 = vunpack.c.l.b16 %v310
        %v494 = vunpack.c.h.b16 %v310
        %v495 = vunpack.c.l.b16 %v311
        %v496 = vunpack.c.h.b16 %v311
        %v497 = vunpack.c.l.b16 %v312
        %v498 = vunpack.c.h.b16 %v312
        %v499 = vunpack.c.l.b16 %v313
        %v500 = vunpack.c.h.b16 %v313
        %v501 = vunpack.c.l.b16 %v314
        %v502 = vunpack.c.h.b16 %v314
        %v503 = vunpack.c.l.b16 %v315
        %v504 = vunpack.c.h.b16 %v315
        %v505 = vunpack.c.l.b16 %v316
        %v506 = vunpack.c.h.b16 %v316
        %v507 = vunpack.c.l.b16 %v317
        %v508 = vunpack.c.h.b16 %v317
        %v509 = vunpack.c.l.b16 %v318
        %v510 = vunpack.c.h.b16 %v318
        %v511 = vunpack.c.l.b16 %v319
        %v512 = vunpack.c.h.b16 %v319
        %v513 = vunpack.c.l.b16 %v320
        %v514 = vunpack.c.h.b16 %v320
        %v515 = vunpack.c.l.b16 %v321
        %v516 = vunpack.c.h.b16 %v321
        %v517 = vunpack.c.l.b16 %v322
        %v518 = vunpack.c.h.b16 %v322
        %v519 = vunpack.c.l.b16 %v323
        %v520 = vunpack.c.h.b16 %v323
        %v521 = vunpack.c.l.b16 %v324
        %v522 = vunpack.c.h.b16 %v324
        %v523 = vunpack.c.l.b16 %v325
        %v524 = vunpack.c.h.b16 %v325
        %v525 = vunpack.c.l.b16 %v326
        %v526 = vunpack.c.h.b16 %v326
        %v527 = vpack.c.b16 %v421, %v419
        %v528 = vpack.c.b16 %v422, %v420
        %v529 = vpack.c.b16 %v425, %v423
        %v530 = vpack.c.b16 %v426, %v424
        %v531 = vpack.c.b16 %v429, %v427
        %v532 = vpack.c.b16 %v430, %v428
        %v533 = vpack.c.b16 %v433, %v431
        %v534 = vpack.c.b16 %v434, %v432
        %v535 = vpack.c.b16 %v437, %v435
        %v536 = vpack.c.b16 %v438, %v436
        %v537 = vpack.c.b16 %v441, %v439
        %v538 = vpack.c.b16 %v442, %v440
        %v539 = vpack.c.b16 %v445, %v443
        %v540 = vpack.c.b16 %v446, %v444
        %v541 = vpack.c.b16 %v449, %v447
        %v542 = vpack.c.b16 %v450, %v448
        %v543 = vpack.c.b16 %v453, %v451
        %v544 = vpack.c.b16 %v454, %v452
        %v545 = vpack.c.b16 %v457, %v455
        %v546 = vpack.c.b16 %v458, %v456
        %v547 = vpack.c.b16 %v461, %v459
        %v548 = vpack.c.b16 %v462, %v460
        %v549 = vpack.c.b16 %v465, %v463
        %v550 = vpack.c.b16 %v466, %v464
        %v551 = vpack.c.b16 %v469, %v467
        %v552 = vpack.c.b16 %v470, %v468
        %v553 = vpack.c.b16 %v473, %v471
        %v554 = vpack.c.b16 %v474, %v472
        %v555 = vpack.c.b16 %v477, %v475
        %v556 = vpack.c.b16 %v478, %v476
        %v557 = vpack.c.b16 %v481, %v479
        %v558 = vpack.c.b16 %v482, %v480
        %v559 = vpack.c.b16 %v485, %v483
        %v560 = vpack.c.b16 %v486, %v484
        %v561 = vpack.c.b16 %v489, %v487
        %v562 = vpack.c.b16 %v490, %v488
        %v563 = vpack.c.b16 %v493, %v491
        %v564 = vpack.c.b16 %v494, %v492
        %v565 = vpack.c.b16 %v497, %v495
        %v566 = vpack.c.b16 %v498, %v496
        %v567 = vpack.c.b16 %v501, %v499
        %v568 = vpack.c.b16 %v502, %v500
        %v569 = vpack.c.b16 %v505, %v503
        %v570 = vpack.c.b16 %v506, %v504
        %v571 = vpack.c.b16 %v509, %v507
        %v572 = vpack.c.b16 %v510, %v508
        %v573 = vpack.c.b16 %v513, %v511
        %v574 = vpack.c.b16 %v514, %v512
        %v575 = vpack.c.b16 %v517, %v515
        %v576 = vpack.c.b16 %v518, %v516
        %v577 = vpack.c.b16 %v521, %v519
        %v578 = vpack.c.b16 %v522, %v520
        %v579 = vpack.c.b16 %v525, %v523
        %v580 = vpack.c.b16 %v526, %v524
        %vm635 = vcmask 392192
        %v637 = vsel %vm635, %v354, 0
        %v640 = vsel %vm635, %v358, 0
        %642 = vmatprep.subr.bf16.mxu0 %v542
        %643 = vmatpush1.bf16.msra.mxu0 %v541
        %644 = vmatprep.subr.bf16.mxu0 %v540
        %645 = vmatpush1.bf16.msra.mxu0 %v539
        %646 = vmatprep.subr.bf16.mxu0 %v538
        %647 = vmatpush1.bf16.msra.mxu0 %v537
        %648 = vmatprep.subr.bf16.mxu0 %v536
        %649 = vmatpush1.bf16.msra.mxu0 %v535
        %650 = vmatprep.subr.bf16.mxu0 %v534
        %651 = vmatpush1.bf16.msra.mxu0 %v533
        %652 = vmatprep.subr.bf16.mxu0 %v532
        %653 = vmatpush1.bf16.msra.mxu0 %v531
        %654 = vmatprep.subr.bf16.mxu0 %v530
        %655 = vmatpush1.bf16.msra.mxu0 %v529
        %656 = vmatprep.subr.bf16.mxu0 %v528
        %657 = vmatpush1.bf16.msra.mxu0 %v527
        %658 = vmatprep.subr.bf16.mxu0 %v558
        %659 = vmatpush2.bf16.msra.mxu0 %v557
        %660 = vmatprep.subr.bf16.mxu0 %v556
        %661 = vmatpush2.bf16.msra.mxu0 %v555
        %662 = vmatprep.subr.bf16.mxu0 %v554
        %663 = vmatpush2.bf16.msra.mxu0 %v553
        %664 = vmatprep.subr.bf16.mxu0 %v552
        %665 = vmatpush2.bf16.msra.mxu0 %v551
        %666 = vmatprep.subr.bf16.mxu0 %v550
        %667 = vmatpush2.bf16.msra.mxu0 %v549
        %668 = vmatprep.subr.bf16.mxu0 %v548
        %669 = vmatpush2.bf16.msra.mxu0 %v547
        %670 = vmatprep.subr.bf16.mxu0 %v546
        %671 = vmatpush2.bf16.msra.mxu0 %v545
        %672 = vmatprep.subr.bf16.mxu0 %v544
        %673 = vmatpush2.bf16.msra.mxu0 %v543
        %674 = vmatprep.mubr.bf16.mxu0 %v352
        %675 = vmatmul.mubr.bf16.gmra.mxu0 %v351
        %v676 = vpop.f32.mrf.mxu0
        %v677 = vadd.f32 0.0, %v676
        %v678 = vpop.f32.mrf.mxu0
        %v679 = vadd.f32 0.0, %v678
        %v680 = vpop.f32.mrf.mxu0
        %v681 = vadd.f32 0.0, %v680
        %v682 = vpop.f32.mrf.mxu0
        %v683 = vadd.f32 0.0, %v682
        %684 = vmatprep.mubr.bf16.mxu0 %v356
        %685 = vmatmul.mubr.bf16.gmra.mxu0 %v355
        %v686 = vpop.f32.mrf.mxu0
        %v687 = vadd.f32 0.0, %v686
        %v688 = vpop.f32.mrf.mxu0
        %v689 = vadd.f32 0.0, %v688
        %v690 = vpop.f32.mrf.mxu0
        %v691 = vadd.f32 0.0, %v690
        %v692 = vpop.f32.mrf.mxu0
        %v693 = vadd.f32 0.0, %v692
        %694 = vdwg.mxu0
        %695 = vmatprep.subr.bf16.mxu0 %v574
        %696 = vmatpush1.bf16.msra.mxu0 %v573
        %697 = vmatprep.subr.bf16.mxu0 %v572
        %698 = vmatpush1.bf16.msra.mxu0 %v571
        %699 = vmatprep.subr.bf16.mxu0 %v570
        %700 = vmatpush1.bf16.msra.mxu0 %v569
        %701 = vmatprep.subr.bf16.mxu0 %v568
        %702 = vmatpush1.bf16.msra.mxu0 %v567
        %703 = vmatprep.subr.bf16.mxu0 %v566
        %704 = vmatpush1.bf16.msra.mxu0 %v565
        %705 = vmatprep.subr.bf16.mxu0 %v564
        %706 = vmatpush1.bf16.msra.mxu0 %v563
        %707 = vmatprep.subr.bf16.mxu0 %v562
        %708 = vmatpush1.bf16.msra.mxu0 %v561
        %709 = vmatprep.subr.bf16.mxu0 %v560
        %710 = vmatpush1.bf16.msra.mxu0 %v559
        %711 = vmatprep.subr.bf16.mxu0 0
        %712 = vmatpush2.bf16.msra.mxu0 0
        %713 = vmatprep.subr.bf16.mxu0 0
        %714 = vmatpush2.bf16.msra.mxu0 0
        %715 = vmatprep.subr.bf16.mxu0 0
        %716 = vmatpush2.bf16.msra.mxu0 0
        %717 = vmatprep.subr.bf16.mxu0 0
        %718 = vmatpush2.bf16.msra.mxu0 0
        %719 = vmatprep.subr.bf16.mxu0 0
        %720 = vmatpush2.bf16.msra.mxu0 0
        %721 = vmatprep.subr.bf16.mxu0 %v580
        %722 = vmatpush2.bf16.msra.mxu0 %v579
        %723 = vmatprep.subr.bf16.mxu0 %v578
        %724 = vmatpush2.bf16.msra.mxu0 %v577
        %725 = vmatprep.subr.bf16.mxu0 %v576
        %726 = vmatpush2.bf16.msra.mxu0 %v575
        %727 = vmatprep.mubr.bf16.mxu0 %v637
        %728 = vmatmul.mubr.bf16.gmra.mxu0 %v353
        %v729 = vpop.f32.mrf.mxu0
        %v730 = vadd.f32 %v677, %v729
        %v731 = vpop.f32.mrf.mxu0
        %v732 = vadd.f32 %v679, %v731
        %v733 = vpop.f32.mrf.mxu0
        %v734 = vadd.f32 %v681, %v733
        %v735 = vpop.f32.mrf.mxu0
        %v736 = vadd.f32 %v683, %v735
        %737 = vmatprep.mubr.bf16.mxu0 %v640
        %738 = vmatmul.mubr.bf16.gmra.mxu0 %v357
        %v739 = vpop.f32.mrf.mxu0
        %v740 = vadd.f32 %v687, %v739
        %v741 = vpop.f32.mrf.mxu0
        %v742 = vadd.f32 %v689, %v741
        %v743 = vpop.f32.mrf.mxu0
        %v744 = vadd.f32 %v691, %v743
        %v745 = vpop.f32.mrf.mxu0
        %v746 = vadd.f32 %v693, %v745
        %747 = vdwg.mxu0
        %748 = vst [vmem:[%s150] sm:$0xff] %v730
        %vm749 = vcmask 523264
        %750 = vst.msk [vmem:[%s150 + $0x8] sm:$0xff] %vm749, %v732
        %751 = vst [vmem:[%s150 + $0x10] sm:$0xff] %v734
        %752 = vst.msk [vmem:[%s150 + $0x18] sm:$0xff] %vm749, %v736
        %753 = vst [vmem:[%s150 + $0x20] sm:$0xff] %v740
        %754 = vst.msk [vmem:[%s150 + $0x28] sm:$0xff] %vm749, %v742
        %755 = vst [vmem:[%s150 + $0x30] sm:$0xff] %v744
        %756 = vst.msk [vmem:[%s150 + $0x38] sm:$0xff] %vm749, %v746
        %s757 = sand.u32 %s85, 1
        %s758 = scalar_lea.sflag [#allocation4], %s757
        %s759 = sand.u32 %s85, 1
        %s760 = smul.addr %s759, 64
        %s761 = scalar_lea.vmem [#allocation3], %s760
        // Predicated region
        $region36: #{conv2d_48_192_s2_p1.1} parent=27 // pred_check
          %p762 = pneg %p95
        $region37: #{conv2d_48_192_s2_p1.1} parent=27 // pred_check_branch
          %764 = sbr.rel (%p762) target = $region39
        $region38: #{conv2d_48_192_s2_p1.1} parent=27 // pred_region
          %s765 = smul.u32 4, %s21
          %s767 = ssub.s32 1024, 1024
          %768 = vsyncadd %s758, %s767
          %s769 = smul.addr %s765, 2
          %s770 = smul.addr %s20, 16
          %s771 = sadd.s32 %s769, %s770
          %s772 = smul.addr %s771, 128
          %s773 = scalar_lea.hbm %s2, %s772
          %s774 = sshll.u32 %s761, 4
          %s775 = int_to_ptr.vmem [resolvable:$true] %s774
          %780 = dma.vmem_to_hbm [thread:$0]  %s775, 1024, %s773, %s758, 256, 256, 16
        $region39: #{conv2d_48_192_s2_p1.1} parent=27 // pred_fallthru
          _
      $region28: #{conv2d_48_192_s2_p1.1} parent=5 // pred_fallthru
        _
      %p781 = scmp.le.s32.totalorder 2, %s11
      // Predicated region
      $region40: #{conv2d_48_192_s2_p1.1} parent=5 // pred_check
        %p782 = pneg %p781
      $region41: #{conv2d_48_192_s2_p1.1} parent=5 // pred_check_branch
        %784 = sbr.rel (%p782) target = $region43
      $region42: #{conv2d_48_192_s2_p1.1} parent=5 // pred_region
        %s785 = ssub.s32 %s11, 2
        // Predicated region
        $region44: #{conv2d_48_192_s2_p1.1} parent=42 // pred_check
          %p786 = pneg %p101
        $region45: #{conv2d_48_192_s2_p1.1} parent=42 // pred_check_branch
          %788 = sbr.rel (%p786) target = $region47
        $region46: #{conv2d_48_192_s2_p1.1} parent=42 // pred_region
          %s789 = sand.u32 %s86, 1
          %s790 = scalar_lea.sflag [#allocation4], %s789
          %s791 = sand.u32 %s86, 1
          %s792 = smul.addr %s791, 64
          %s793 = scalar_lea.vmem [#allocation3], %s792
          %794 = dma.done %s790, 1024
        $region47: #{conv2d_48_192_s2_p1.1} parent=42 // pred_fallthru
          _
      $region43: #{conv2d_48_192_s2_p1.1} parent=5 // pred_fallthru
        _
    $region6: #{conv2d_48_192_s2_p1.1} parent=1 // loop_footer
      %s15 = sadd.s32 1, %s11
    $region7: #{conv2d_48_192_s2_p1.1} parent=1 // loop_footer_branch
      %10 = sbr.rel target = $region3
    $region8: #{conv2d_48_192_s2_p1.1} parent=1 // loop_exit
      _
    %795 = vsyncpa [#allocation4], 1
    %s796 = scalar_lea.sflag [#allocation4], 1
    %797 = vsyncpa %s796, 1

</llo_original>
